<compile_context>
chip_gen: v7x
topology: tpu7x:2x2x1
jax: 0.10.0
libtpu: 0.0.40
codegen_flags: <defaults>
</compile_context>

<pallas_src>
import functools

import jax
import jax.numpy as jnp
import numpy as np
from jax.experimental import pallas as pl
from jax.experimental.pallas import tpu as pltpu


def _round_up(x, m):
    return (x + m - 1) // m * m


def time_domain_encoder_kernel(
    t_ref,      # [1, 1, TILE] f32   (batch on lanes)
    lut_ref,    # [12] f32 in SMEM   month LUT (m-encoder folded, + m_b3 + t_b2)
    tw_ref,     # [H, 2]  f32 VMEM   col 0 = t_w1^T, col 1 = t_b1^T
    tw2_ref,    # [1, H]  f32 VMEM   t_w2^T
    o_ref,      # [1, 1, TILE] f32
    *, n_months, t_period, n_periodic,
):
    t = t_ref[0]                                              # [1, TILE]

    # ---- month branch: 12-entry scalar LUT via compare-selects (VPU only) ----
    # m = trunc(t % 12); mod >= 0 so trunc == floor; clip matches gather clamping.
    mi = jnp.mod(t, float(n_months)).astype(jnp.int32)
    mi = jnp.clip(mi, 0, n_months - 1)                        # [1, TILE]
    xm = jnp.zeros_like(t)
    for j in range(n_months):                                 # static 12-way unroll
        xm = xm + lut_ref[j] * (mi == j).astype(jnp.float32)

    # ---- t branch (PartiallyPeriodicMLP) ----
    w1 = tw_ref[:, 0:1]                                       # [H, 1]
    b1 = tw_ref[:, 1:2]                                       # [H, 1]
    z = w1 * t + b1                                           # [H, TILE] (K=1 on VPU)
    hid = z.shape[0]
    scale = 2.0 * jnp.pi / t_period
    tw2 = tw2_ref[...]                                        # [1, H]

    if (0 < n_periodic < hid) and (n_periodic % 8 == 0):
        # sublane-aligned static split: cos only on the periodic row band.
        ht_p = jnp.cos(scale * z[:n_periodic])                # [n_per,   TILE]
        ht_r = jnp.maximum(z[n_periodic:], 0.0)               # [H-n_per, TILE]
        xt = (jnp.dot(tw2[:, :n_periodic], ht_p,
                      preferred_element_type=jnp.float32)
              + jnp.dot(tw2[:, n_periodic:], ht_r,
                        preferred_element_type=jnp.float32))  # [1, TILE]
    else:
        # general fallback: row mask built in-kernel (no captured constants).
        row = jax.lax.broadcasted_iota(jnp.int32, z.shape, 0)
        ht = jnp.where(row < n_periodic,
                       jnp.cos(scale * z), jnp.maximum(z, 0.0))
        xt = jnp.dot(tw2, ht, preferred_element_type=jnp.float32)

    o_ref[0] = xm + xt                                        # [1, TILE]


def time_domain_encoder(t, params, *, t_period, periodic_ratio, max_tile=8192):
    n = t.shape[0]
    hid = params["m_w1"].shape[1]
    n_per = int(round(hid * periodic_ratio))
    n_months = 12

    # ---- offline parameter algebra (trace-time, outside the kernel) ----
    # 12-entry month LUT: full m_encoder folded; output biases m_b3 + t_b2 folded in.
    h1 = jnp.maximum(params["emb"] @ params["m_w1"] + params["m_b1"], 0.0)   # [12,H]
    h2 = jnp.maximum(h1 @ params["m_w2"] + params["m_b2"], 0.0)              # [12,H]
    lut = (h2 @ params["m_w3"] + params["m_b3"] + params["t_b2"])            # [12,1]
    lut = lut.reshape(n_months).astype(jnp.float32)

    tw = jnp.concatenate(
        [params["t_w1"].reshape(hid, 1), params["t_b1"].reshape(hid, 1)],
        axis=1).astype(jnp.float32)                                          # [H,2]
    tw2_t = params["t_w2"].reshape(hid, 1).T.astype(jnp.float32)             # [1,H]

    # ---- lane-dense batch tiling: [N,1] -> [G, 1, TILE] (batch on lanes) ----
    # Target >= 2 grid steps when N allows (v7x megacore), largest lane tile
    # up to max_tile, minimal padded tail.
    g_target = 2
    tile_n = min(max_tile, max(128, _round_up(-(-n // g_target), 128)))
    n_pad = _round_up(n, tile_n)
    g = n_pad // tile_n
    t_flat = t.reshape(n).astype(jnp.float32)
    if n_pad != n:
        t_flat = jnp.pad(t_flat, (0, n_pad - n))
    t3 = t_flat.reshape(g, 1, tile_n)

    kernel = functools.partial(
        time_domain_encoder_kernel,
        n_months=n_months, t_period=float(t_period), n_periodic=n_per)

    out3 = pl.pallas_call(
        kernel,
        out_shape=jax.ShapeDtypeStruct((g, 1, tile_n), jnp.float32),
        grid=(g,),
        in_specs=[
            pl.BlockSpec((1, 1, tile_n), lambda i: (i, 0, 0)),       # t tile
            pl.BlockSpec(memory_space=pltpu.MemorySpace.SMEM),       # lut (12 scalars)
            pl.BlockSpec(tw.shape, lambda i: (0, 0)),                # resident [H,2]
            pl.BlockSpec(tw2_t.shape, lambda i: (0, 0)),             # resident [1,H]
        ],
        out_specs=pl.BlockSpec((1, 1, tile_n), lambda i: (i, 0, 0)),
        compiler_params=pltpu.CompilerParams(
            dimension_semantics=("parallel",)),
    )(t3, lut, tw, tw2_t)

    return out3.reshape(n_pad, 1)[:n]


def _reference(t, params, *, t_period, periodic_ratio):
    """Pure-JAX reference with the original (unfused) semantics."""
    hid = params["m_w1"].shape[1]
    n_per = int(round(hid * periodic_ratio))
    m = jnp.mod(t, 12.0).astype(jnp.int32).squeeze(1)          # [N]
    m_embed = params["emb"][m]                                  # [N, E]
    h = jnp.maximum(m_embed @ params["m_w1"] + params["m_b1"], 0.0)
    h = jnp.maximum(h @ params["m_w2"] + params["m_b2"], 0.0)
    xm = h @ params["m_w3"] + params["m_b3"]
    z = t @ params["t_w1"] + params["t_b1"]
    zp = jnp.cos((2.0 * jnp.pi / t_period) * z[:, :n_per])
    zn = jnp.maximum(z[:, n_per:], 0.0)
    ht = jnp.concatenate([zp, zn], axis=1)
    xt = ht @ params["t_w2"] + params["t_b2"]
    return xt + xm


def init_params(key, m_embed_dim, hid_dim):
    ks = jax.random.split(key, 12)
    s = 0.1
    return {
        "emb":  jax.random.normal(ks[0], (12, m_embed_dim), jnp.float32) * s,
        # m_encoder (CustomMLP: E->H->H->1)
        "m_w1": jax.random.normal(ks[1], (m_embed_dim, hid_dim), jnp.float32) * s,
        "m_b1": jax.random.normal(ks[2], (1, hid_dim), jnp.float32) * s,
        "m_w2": jax.random.normal(ks[3], (hid_dim, hid_dim), jnp.float32) * s,
        "m_b2": jax.random.normal(ks[4], (1, hid_dim), jnp.float32) * s,
        "m_w3": jax.random.normal(ks[5], (hid_dim, 1), jnp.float32) * s,
        "m_b3": jax.random.normal(ks[6], (1, 1), jnp.float32) * s,
        # t_encoder (PartiallyPeriodicMLP: 1->H->1)
        "t_w1": jax.random.normal(ks[7], (1, hid_dim), jnp.float32) * s,
        "t_b1": jax.random.normal(ks[8], (1, hid_dim), jnp.float32) * s,
        "t_w2": jax.random.normal(ks[9], (hid_dim, 1), jnp.float32) * s,
        "t_b2": jax.random.normal(ks[10], (1, 1), jnp.float32) * s,
    }


if __name__ == "__main__":
    key = jax.random.PRNGKey(0)
    k_t, k_p = jax.random.split(key)

    batch = 300              # exercises multi-tile grid (g=2) + padded tail
    m_embed_dim = 8
    hid_dim = 32
    t_period = 12.0
    periodic_ratio = 0.25    # round(0.25*32)=8 -> sublane-aligned static split

    # t: [batch, 1] float timestamps (non-negative, as implied by month indexing).
    t = jax.random.uniform(k_t, (batch, 1), jnp.float32, minval=0.0, maxval=120.0)
    params = init_params(k_p, m_embed_dim, hid_dim)

    out = time_domain_encoder(t, params, t_period=t_period,
                              periodic_ratio=periodic_ratio)
    out = jax.block_until_ready(out)

    ref = jax.block_until_ready(
        _reference(t, params, t_period=t_period, periodic_ratio=periodic_ratio))

    np.testing.assert_allclose(np.asarray(out), np.asarray(ref),
                               rtol=1e-5, atol=1e-5)
    print("KERNEL_OK")
</pallas_src>

<mosaic_0001>
module attributes {stable_mosaic.version = 11 : i64} {
  func.func @time_domain_encoder_kernel(%arg0: i32, %arg1: memref<1x1x256xf32, #tpu.memory_space<vmem>>, %arg2: memref<12xf32, #tpu.memory_space<smem>>, %arg3: memref<32x2xf32, #tpu.memory_space<vmem>>, %arg4: memref<1x32xf32, #tpu.memory_space<vmem>>, %arg5: memref<1x1x256xf32, #tpu.memory_space<vmem>>) attributes {dimension_semantics = [#tpu.dimension_semantics<parallel>], iteration_bounds = array<i64: 2>, scalar_prefetch = 0 : i64, scratch_operands = 0 : i64, tpu.core_type = #tpu.core_type<tc>, window_params = [{transform_indices = @transform_0, window_bounds = array<i64: 1, 1, 256>}, {transform_indices = @transform_1, window_bounds = array<i64: 12>}, {pipeline_mode = #tpu.pipeline_mode<synchronous>, transform_indices = @transform_2, window_bounds = array<i64: 32, 2>}, {pipeline_mode = #tpu.pipeline_mode<synchronous>, transform_indices = @transform_3, window_bounds = array<i64: 1, 32>}, {transform_indices = @transform_4, window_bounds = array<i64: 1, 1, 256>}]} {
    %c0 = arith.constant 0 : index
    %c0_0 = arith.constant 0 : index
    %c0_1 = arith.constant 0 : index
    %0 = vector.load %arg1[%c0, %c0_0, %c0_1] : memref<1x1x256xf32, #tpu.memory_space<vmem>>, vector<1x1x256xf32>
    %1 = vector.shape_cast %0 : vector<1x1x256xf32> to vector<1x256xf32>
    %cst = arith.constant 1.200000e+01 : f32
    %2 = vector.broadcast %cst : f32 to vector<1x256xf32>
    %3 = arith.remf %1, %2 : vector<1x256xf32>
    %cst_2 = arith.constant 0.000000e+00 : f32
    %4 = vector.broadcast %cst_2 : f32 to vector<1x256xf32>
    %5 = arith.cmpf one, %3, %4 : vector<1x256xf32>
    %cst_3 = arith.constant 0.000000e+00 : f32
    %6 = vector.broadcast %cst_3 : f32 to vector<1x256xf32>
    %7 = arith.cmpf olt, %3, %6 : vector<1x256xf32>
    %cst_4 = arith.constant 0.000000e+00 : f32
    %8 = arith.cmpf olt, %cst, %cst_4 : f32
    %9 = vector.broadcast %8 : i1 to vector<1x256xi1>
    %10 = vector.broadcast %9 : vector<1x256xi1> to vector<1x256xi1>
    %11 = arith.xori %7, %10 : vector<1x256xi1>
    %12 = arith.andi %11, %5 : vector<1x256xi1>
    %13 = vector.broadcast %cst : f32 to vector<1x256xf32>
    %14 = arith.addf %3, %13 : vector<1x256xf32>
    %15 = arith.select %12, %14, %3 : vector<1x256xi1>, vector<1x256xf32>
    %16 = arith.fptosi %15 : vector<1x256xf32> to vector<1x256xi32>
    %c0_i32 = arith.constant 0 : i32
    %c11_i32 = arith.constant 11 : i32
    %17 = vector.broadcast %c0_i32 : i32 to vector<1x256xi32>
    %18 = arith.maxsi %17, %16 : vector<1x256xi32>
    %19 = vector.broadcast %c11_i32 : i32 to vector<1x256xi32>
    %20 = arith.minsi %19, %18 : vector<1x256xi32>
    %cst_5 = arith.constant 0.000000e+00 : f32
    %21 = vector.broadcast %cst_5 : f32 to vector<1x256xf32>
    %c0_6 = arith.constant 0 : index
    %22 = memref.load %arg2[%c0_6] : memref<12xf32, #tpu.memory_space<smem>>
    %c0_i32_7 = arith.constant 0 : i32
    %23 = vector.broadcast %c0_i32_7 : i32 to vector<1x256xi32>
    %24 = arith.cmpi eq, %20, %23 : vector<1x256xi32>
    %25 = arith.extui %24 : vector<1x256xi1> to vector<1x256xi32>
    %26 = arith.sitofp %25 : vector<1x256xi32> to vector<1x256xf32>
    %27 = vector.broadcast %22 : f32 to vector<1x256xf32>
    %28 = arith.mulf %27, %26 : vector<1x256xf32>
    %29 = arith.addf %21, %28 : vector<1x256xf32>
    %c1 = arith.constant 1 : index
    %30 = memref.load %arg2[%c1] : memref<12xf32, #tpu.memory_space<smem>>
    %c1_i32 = arith.constant 1 : i32
    %31 = vector.broadcast %c1_i32 : i32 to vector<1x256xi32>
    %32 = arith.cmpi eq, %20, %31 : vector<1x256xi32>
    %33 = arith.extui %32 : vector<1x256xi1> to vector<1x256xi32>
    %34 = arith.sitofp %33 : vector<1x256xi32> to vector<1x256xf32>
    %35 = vector.broadcast %30 : f32 to vector<1x256xf32>
    %36 = arith.mulf %35, %34 : vector<1x256xf32>
    %37 = arith.addf %29, %36 : vector<1x256xf32>
    %c2 = arith.constant 2 : index
    %38 = memref.load %arg2[%c2] : memref<12xf32, #tpu.memory_space<smem>>
    %c2_i32 = arith.constant 2 : i32
    %39 = vector.broadcast %c2_i32 : i32 to vector<1x256xi32>
    %40 = arith.cmpi eq, %20, %39 : vector<1x256xi32>
    %41 = arith.extui %40 : vector<1x256xi1> to vector<1x256xi32>
    %42 = arith.sitofp %41 : vector<1x256xi32> to vector<1x256xf32>
    %43 = vector.broadcast %38 : f32 to vector<1x256xf32>
    %44 = arith.mulf %43, %42 : vector<1x256xf32>
    %45 = arith.addf %37, %44 : vector<1x256xf32>
    %c3 = arith.constant 3 : index
    %46 = memref.load %arg2[%c3] : memref<12xf32, #tpu.memory_space<smem>>
    %c3_i32 = arith.constant 3 : i32
    %47 = vector.broadcast %c3_i32 : i32 to vector<1x256xi32>
    %48 = arith.cmpi eq, %20, %47 : vector<1x256xi32>
    %49 = arith.extui %48 : vector<1x256xi1> to vector<1x256xi32>
    %50 = arith.sitofp %49 : vector<1x256xi32> to vector<1x256xf32>
    %51 = vector.broadcast %46 : f32 to vector<1x256xf32>
    %52 = arith.mulf %51, %50 : vector<1x256xf32>
    %53 = arith.addf %45, %52 : vector<1x256xf32>
    %c4 = arith.constant 4 : index
    %54 = memref.load %arg2[%c4] : memref<12xf32, #tpu.memory_space<smem>>
    %c4_i32 = arith.constant 4 : i32
    %55 = vector.broadcast %c4_i32 : i32 to vector<1x256xi32>
    %56 = arith.cmpi eq, %20, %55 : vector<1x256xi32>
    %57 = arith.extui %56 : vector<1x256xi1> to vector<1x256xi32>
    %58 = arith.sitofp %57 : vector<1x256xi32> to vector<1x256xf32>
    %59 = vector.broadcast %54 : f32 to vector<1x256xf32>
    %60 = arith.mulf %59, %58 : vector<1x256xf32>
    %61 = arith.addf %53, %60 : vector<1x256xf32>
    %c5 = arith.constant 5 : index
    %62 = memref.load %arg2[%c5] : memref<12xf32, #tpu.memory_space<smem>>
    %c5_i32 = arith.constant 5 : i32
    %63 = vector.broadcast %c5_i32 : i32 to vector<1x256xi32>
    %64 = arith.cmpi eq, %20, %63 : vector<1x256xi32>
    %65 = arith.extui %64 : vector<1x256xi1> to vector<1x256xi32>
    %66 = arith.sitofp %65 : vector<1x256xi32> to vector<1x256xf32>
    %67 = vector.broadcast %62 : f32 to vector<1x256xf32>
    %68 = arith.mulf %67, %66 : vector<1x256xf32>
    %69 = arith.addf %61, %68 : vector<1x256xf32>
    %c6 = arith.constant 6 : index
    %70 = memref.load %arg2[%c6] : memref<12xf32, #tpu.memory_space<smem>>
    %c6_i32 = arith.constant 6 : i32
    %71 = vector.broadcast %c6_i32 : i32 to vector<1x256xi32>
    %72 = arith.cmpi eq, %20, %71 : vector<1x256xi32>
    %73 = arith.extui %72 : vector<1x256xi1> to vector<1x256xi32>
    %74 = arith.sitofp %73 : vector<1x256xi32> to vector<1x256xf32>
    %75 = vector.broadcast %70 : f32 to vector<1x256xf32>
    %76 = arith.mulf %75, %74 : vector<1x256xf32>
    %77 = arith.addf %69, %76 : vector<1x256xf32>
    %c7 = arith.constant 7 : index
    %78 = memref.load %arg2[%c7] : memref<12xf32, #tpu.memory_space<smem>>
    %c7_i32 = arith.constant 7 : i32
    %79 = vector.broadcast %c7_i32 : i32 to vector<1x256xi32>
    %80 = arith.cmpi eq, %20, %79 : vector<1x256xi32>
    %81 = arith.extui %80 : vector<1x256xi1> to vector<1x256xi32>
    %82 = arith.sitofp %81 : vector<1x256xi32> to vector<1x256xf32>
    %83 = vector.broadcast %78 : f32 to vector<1x256xf32>
    %84 = arith.mulf %83, %82 : vector<1x256xf32>
    %85 = arith.addf %77, %84 : vector<1x256xf32>
    %c8 = arith.constant 8 : index
    %86 = memref.load %arg2[%c8] : memref<12xf32, #tpu.memory_space<smem>>
    %c8_i32 = arith.constant 8 : i32
    %87 = vector.broadcast %c8_i32 : i32 to vector<1x256xi32>
    %88 = arith.cmpi eq, %20, %87 : vector<1x256xi32>
    %89 = arith.extui %88 : vector<1x256xi1> to vector<1x256xi32>
    %90 = arith.sitofp %89 : vector<1x256xi32> to vector<1x256xf32>
    %91 = vector.broadcast %86 : f32 to vector<1x256xf32>
    %92 = arith.mulf %91, %90 : vector<1x256xf32>
    %93 = arith.addf %85, %92 : vector<1x256xf32>
    %c9 = arith.constant 9 : index
    %94 = memref.load %arg2[%c9] : memref<12xf32, #tpu.memory_space<smem>>
    %c9_i32 = arith.constant 9 : i32
    %95 = vector.broadcast %c9_i32 : i32 to vector<1x256xi32>
    %96 = arith.cmpi eq, %20, %95 : vector<1x256xi32>
    %97 = arith.extui %96 : vector<1x256xi1> to vector<1x256xi32>
    %98 = arith.sitofp %97 : vector<1x256xi32> to vector<1x256xf32>
    %99 = vector.broadcast %94 : f32 to vector<1x256xf32>
    %100 = arith.mulf %99, %98 : vector<1x256xf32>
    %101 = arith.addf %93, %100 : vector<1x256xf32>
    %c10 = arith.constant 10 : index
    %102 = memref.load %arg2[%c10] : memref<12xf32, #tpu.memory_space<smem>>
    %c10_i32 = arith.constant 10 : i32
    %103 = vector.broadcast %c10_i32 : i32 to vector<1x256xi32>
    %104 = arith.cmpi eq, %20, %103 : vector<1x256xi32>
    %105 = arith.extui %104 : vector<1x256xi1> to vector<1x256xi32>
    %106 = arith.sitofp %105 : vector<1x256xi32> to vector<1x256xf32>
    %107 = vector.broadcast %102 : f32 to vector<1x256xf32>
    %108 = arith.mulf %107, %106 : vector<1x256xf32>
    %109 = arith.addf %101, %108 : vector<1x256xf32>
    %c11 = arith.constant 11 : index
    %110 = memref.load %arg2[%c11] : memref<12xf32, #tpu.memory_space<smem>>
    %c11_i32_8 = arith.constant 11 : i32
    %111 = vector.broadcast %c11_i32_8 : i32 to vector<1x256xi32>
    %112 = arith.cmpi eq, %20, %111 : vector<1x256xi32>
    %113 = arith.extui %112 : vector<1x256xi1> to vector<1x256xi32>
    %114 = arith.sitofp %113 : vector<1x256xi32> to vector<1x256xf32>
    %115 = vector.broadcast %110 : f32 to vector<1x256xf32>
    %116 = arith.mulf %115, %114 : vector<1x256xf32>
    %117 = arith.addf %109, %116 : vector<1x256xf32>
    %c0_9 = arith.constant 0 : index
    %c0_10 = arith.constant 0 : index
    %118 = vector.load %arg3[%c0_9, %c0_10] : memref<32x2xf32, #tpu.memory_space<vmem>>, vector<32x1xf32>
    %c0_11 = arith.constant 0 : index
    %c1_12 = arith.constant 1 : index
    %119 = vector.load %arg3[%c0_11, %c1_12] : memref<32x2xf32, #tpu.memory_space<vmem>>, vector<32x1xf32>
    %120 = vector.broadcast %118 : vector<32x1xf32> to vector<32x256xf32>
    %121 = vector.broadcast %1 : vector<1x256xf32> to vector<32x256xf32>
    %122 = arith.mulf %120, %121 : vector<32x256xf32>
    %123 = vector.broadcast %119 : vector<32x1xf32> to vector<32x256xf32>
    %124 = arith.addf %122, %123 : vector<32x256xf32>
    %c0_13 = arith.constant 0 : index
    %c0_14 = arith.constant 0 : index
    %125 = vector.load %arg4[%c0_13, %c0_14] : memref<1x32xf32, #tpu.memory_space<vmem>>, vector<1x32xf32>
    %126 = vector.extract_strided_slice %124 {offsets = [0, 0], sizes = [8, 256], strides = [1, 1]} : vector<32x256xf32> to vector<8x256xf32>
    %cst_15 = arith.constant 0.52359879 : f32
    %127 = vector.broadcast %cst_15 : f32 to vector<8x256xf32>
    %128 = arith.mulf %127, %126 : vector<8x256xf32>
    %129 = math.cos %128 : vector<8x256xf32>
    %130 = vector.extract_strided_slice %124 {offsets = [8, 0], sizes = [24, 256], strides = [1, 1]} : vector<32x256xf32> to vector<24x256xf32>
    %cst_16 = arith.constant 0.000000e+00 : f32
    %131 = vector.broadcast %cst_16 : f32 to vector<24x256xf32>
    %132 = arith.maximumf %130, %131 : vector<24x256xf32>
    %133 = vector.extract_strided_slice %125 {offsets = [0, 0], sizes = [1, 8], strides = [1, 1]} : vector<1x32xf32> to vector<1x8xf32>
    %cst_17 = arith.constant dense<0.000000e+00> : vector<1x256xf32>
    %134 = tpu.matmul %133, %129, %cst_17 {dimension_numbers = #tpu.dot_dimension_numbers<[1], [0], [0], [1], [0, 0, 1, 1], [], []>} : vector<1x8xf32>, vector<8x256xf32>, vector<1x256xf32> -> vector<1x256xf32>
    %135 = vector.extract_strided_slice %125 {offsets = [0, 8], sizes = [1, 24], strides = [1, 1]} : vector<1x32xf32> to vector<1x24xf32>
    %cst_18 = arith.constant dense<0.000000e+00> : vector<1x256xf32>
    %136 = tpu.matmul %135, %132, %cst_18 {dimension_numbers = #tpu.dot_dimension_numbers<[1], [0], [0], [1], [0, 0, 1, 1], [], []>} : vector<1x24xf32>, vector<24x256xf32>, vector<1x256xf32> -> vector<1x256xf32>
    %137 = arith.addf %134, %136 : vector<1x256xf32>
    %138 = arith.addf %117, %137 : vector<1x256xf32>
    %c0_19 = arith.constant 0 : index
    %c0_20 = arith.constant 0 : index
    %c0_21 = arith.constant 0 : index
    %139 = vector.load %arg5[%c0_19, %c0_20, %c0_21] : memref<1x1x256xf32, #tpu.memory_space<vmem>>, vector<1x1x256xf32>
    %140 = vector.shape_cast %139 : vector<1x1x256xf32> to vector<1x256xf32>
    %141 = vector.shape_cast %138 : vector<1x256xf32> to vector<1x1x256xf32>
    tpu.vector_store %arg5[%c0_19, %c0_20, %c0_21], %141 {strides = array<i32>} : memref<1x1x256xf32, #tpu.memory_space<vmem>>, vector<1x1x256xf32>,
    return
  }
  func.func @transform_0(%arg0: i32) -> (i32, i32, i32) {
    %c0_i32 = arith.constant 0 : i32
    %c0_i32_0 = arith.constant 0 : i32
    %c0_i32_1 = arith.constant 0 : i32
    return %arg0, %c0_i32, %c0_i32_0 : i32, i32, i32
  }
  func.func @transform_1(%arg0: i32) -> i32 {
    %c0_i32 = arith.constant 0 : i32
    %c0_i32_0 = arith.constant 0 : i32
    return %c0_i32 : i32
  }
  func.func @transform_2(%arg0: i32) -> (i32, i32) {
    %c0_i32 = arith.constant 0 : i32
    %c0_i32_0 = arith.constant 0 : i32
    %c0_i32_1 = arith.constant 0 : i32
    return %c0_i32, %c0_i32_0 : i32, i32
  }
  func.func @transform_3(%arg0: i32) -> (i32, i32) {
    %c0_i32 = arith.constant 0 : i32
    %c0_i32_0 = arith.constant 0 : i32
    %c0_i32_1 = arith.constant 0 : i32
    return %c0_i32, %c0_i32_0 : i32, i32
  }
  func.func @transform_4(%arg0: i32) -> (i32, i32, i32) {
    %c0_i32 = arith.constant 0 : i32
    %c0_i32_0 = arith.constant 0 : i32
    %c0_i32_1 = arith.constant 0 : i32
    return %arg0, %c0_i32, %c0_i32_0 : i32, i32, i32
  }
}

</mosaic_0001>

<llo_original>
// kernel: tpu_custom_call.1
$region0: #{tpu_custom_call.1}
  #allocation0 [shape = 'u32[]', space=smem, size = 0x4, offset = 0x4, fixed_abs, tag = 'smem constant byte address 0x4 - core index']
  #allocation1 [shape = 'u32[144,128]{1,0:T(1,128)}', space=vmem, size = 0x12000, scoped, tag = 'internal scratch']
  %s0 = inlined_call_operand.vmem [shape: f32[2,1,256], index: 0, kind: input, shape index: {}]
  %s1 = inlined_call_operand.vmem [shape: f32[12], index: 1, kind: input, shape index: {}]
  %s2 = inlined_call_operand.vmem [shape: f32[32,2], index: 2, kind: input, shape index: {}]
  %s3 = inlined_call_operand.vmem [shape: f32[1,32], index: 3, kind: input, shape index: {}]
  %s4 = inlined_call_operand.hbm [shape: f32[2,1,256], index: 4, kind: output, shape index: {}]
  %s5 = sld [smem:[#allocation0]]
  $region53: #{tpu_custom_call.1} parent=0
    _
  %s7 = ssub.s32 1, %s5
  %s8 = scalar_select 0, %s7, %s5
  $region1: #{tpu_custom_call.1} parent=0
    #allocation2 [shape = 'u8[512]{0}', space=smem, size = 0x200, scoped, tag = 'input window, operand 1, single buffered']
    #allocation3 [shape = 's32[2]{0}', space=sflag, size = 0x8, scoped, tag = 'scoped memory for tpu_custom_call.1']
    #allocation4 [shape = 's32[2]{0}', space=sflag, size = 0x8, scoped, tag = 'scoped memory for tpu_custom_call.1']
    #allocation5 [shape = 'u8[2048]{0}', space=vmem, size = 0x800, scoped, tag = 'output window, operand 0']
    %9 = vsyncpa [#allocation4], 0
    %10 = vsyncpa [#allocation3], 0
    %s11 = scalar_lea.sflag [#allocation3], 1
    %12 = vsyncpa %s11, 0
    loop: start=0, step=1, limit=4
    $region2: #{tpu_custom_call.1} parent=1 // loop_pre_header
      _
    $region3: #{tpu_custom_call.1} parent=1 // loop_header
      %s14 = sphi 0, %s18
      %p15 = scmp.ge.s32.totalorder %s14, 4
      %s24 = sphi 0, %s26
      %s27 = sphi 0, %s24
      %s28 = sphi 0, %s27
      %s44 = sphi 0, %s28
      %s48 = sphi 0, %s48
      %s50 = sphi 0, %s48
      %s51 = sphi 0, %s50
      %s65 = sphi 0, %s51
      %s69 = sphi 0, %s69
      %s71 = sphi 0, %s69
      %s72 = sphi 0, %s71
      %s86 = sphi 0, %s72
      %s90 = sphi 0, %s90
      %s92 = sphi 0, %s90
      %s93 = sphi 0, %s92
      %s107 = sphi 0, %s93
      %s113 = sphi 0, %s115
      %s116 = sphi 0, %s113
      %s117 = sphi 0, %s116
      %s133 = sphi 0, %s117
    $region4: #{tpu_custom_call.1} parent=1 // loop_header_branch
      %17 = sbr.rel (%p15) target = $region8
    $region5: #{tpu_custom_call.1} parent=1 // loop_body
      %s19 = ssub.s32 %s14, 1
      %s20 = ssub.s32 %s14, 2
      %s21 = sadd.s32 %s14, 1
      %s22 = ssub.s32 %s14, %s21
      %p23 = scmp.eq.s32.totalorder %s22, 0
      %s25 = sadd.s32 %s24, 1
      %s26 = scalar_select %p23, %s24, %s25
      %p29 = pneg %p23
      %p30 = scmp.eq.s32.totalorder %s14, 1
      %p31 = por %p29, %p30
      %p32 = scmp.ne.s32.totalorder %s24, %s27
      %p33 = scmp.eq.s32.totalorder %s14, 0
      %p34 = por %p32, %p33
      %p35 = scmp.ne.s32.totalorder %s24, %s27
      %p36 = scmp.eq.s32.totalorder %s19, 1
      %p37 = por %p35, %p36
      %p38 = scmp.ne.s32.totalorder %s27, %s28
      %p39 = scmp.eq.s32.totalorder %s19, 0
      %p40 = por %p38, %p39
      %p41 = scmp.ne.s32.totalorder %s27, %s28
      %p42 = scmp.eq.s32.totalorder %s20, 1
      %p43 = por %p41, %p42
      %p45 = scmp.ne.s32.totalorder %s28, %s44
      %p46 = scmp.eq.s32.totalorder %s20, 0
      %p47 = por %p45, %p46
      %s49 = sadd.s32 %s48, 1
      %p52 = scmp.eq.s32.totalorder %s14, 1
      %p53 = scmp.ne.s32.totalorder %s48, %s50
      %p54 = scmp.eq.s32.totalorder %s14, 0
      %p55 = por %p53, %p54
      %p56 = scmp.ne.s32.totalorder %s48, %s50
      %p57 = scmp.eq.s32.totalorder %s19, 1
      %p58 = por %p56, %p57
      %p59 = scmp.ne.s32.totalorder %s50, %s51
      %p60 = scmp.eq.s32.totalorder %s19, 0
      %p61 = por %p59, %p60
      %p62 = scmp.ne.s32.totalorder %s50, %s51
      %p63 = scmp.eq.s32.totalorder %s20, 1
      %p64 = por %p62, %p63
      %p66 = scmp.ne.s32.totalorder %s51, %s65
      %p67 = scmp.eq.s32.totalorder %s20, 0
      %p68 = por %p66, %p67
      %s70 = sadd.s32 %s69, 1
      %p73 = scmp.eq.s32.totalorder %s14, 1
      %p74 = scmp.ne.s32.totalorder %s69, %s71
      %p75 = scmp.eq.s32.totalorder %s14, 0
      %p76 = por %p74, %p75
      %p77 = scmp.ne.s32.totalorder %s69, %s71
      %p78 = scmp.eq.s32.totalorder %s19, 1
      %p79 = por %p77, %p78
      %p80 = scmp.ne.s32.totalorder %s71, %s72
      %p81 = scmp.eq.s32.totalorder %s19, 0
      %p82 = por %p80, %p81
      %p83 = scmp.ne.s32.totalorder %s71, %s72
      %p84 = scmp.eq.s32.totalorder %s20, 1
      %p85 = por %p83, %p84
      %p87 = scmp.ne.s32.totalorder %s72, %s86
      %p88 = scmp.eq.s32.totalorder %s20, 0
      %p89 = por %p87, %p88
      %s91 = sadd.s32 %s90, 1
      %p94 = scmp.eq.s32.totalorder %s14, 1
      %p95 = scmp.ne.s32.totalorder %s90, %s92
      %p96 = scmp.eq.s32.totalorder %s14, 0
      %p97 = por %p95, %p96
      %p98 = scmp.ne.s32.totalorder %s90, %s92
      %p99 = scmp.eq.s32.totalorder %s19, 1
      %p100 = por %p98, %p99
      %p101 = scmp.ne.s32.totalorder %s92, %s93
      %p102 = scmp.eq.s32.totalorder %s19, 0
      %p103 = por %p101, %p102
      %p104 = scmp.ne.s32.totalorder %s92, %s93
      %p105 = scmp.eq.s32.totalorder %s20, 1
      %p106 = por %p104, %p105
      %p108 = scmp.ne.s32.totalorder %s93, %s107
      %p109 = scmp.eq.s32.totalorder %s20, 0
      %p110 = por %p108, %p109
      %s111 = ssub.s32 %s14, %s21
      %p112 = scmp.eq.s32.totalorder %s111, 0
      %s114 = sadd.s32 %s113, 1
      %s115 = scalar_select %p112, %s113, %s114
      %p118 = pneg %p112
      %p119 = scmp.eq.s32.totalorder %s14, 1
      %p120 = por %p118, %p119
      %p121 = scmp.ne.s32.totalorder %s113, %s116
      %p122 = scmp.eq.s32.totalorder %s14, 0
      %p123 = por %p121, %p122
      %p124 = scmp.ne.s32.totalorder %s113, %s116
      %p125 = scmp.eq.s32.totalorder %s19, 1
      %p126 = por %p124, %p125
      %p127 = scmp.ne.s32.totalorder %s116, %s117
      %p128 = scmp.eq.s32.totalorder %s19, 0
      %p129 = por %p127, %p128
      %p130 = scmp.ne.s32.totalorder %s116, %s117
      %p131 = scmp.eq.s32.totalorder %s20, 1
      %p132 = por %p130, %p131
      %p134 = scmp.ne.s32.totalorder %s117, %s133
      %p135 = scmp.eq.s32.totalorder %s20, 0
      %p136 = por %p134, %p135
      %p137 = scmp.le.s32.totalorder 1, %s14
      %p138 = scmp.lt.s32.totalorder %s14, 3
      %p139 = pnand %p137, %p138
      %p140 = pneg %p139
      // Predicated region
      $region9: #{tpu_custom_call.1} parent=5 // pred_check
        _
      $region10: #{tpu_custom_call.1} parent=5 // pred_check_branch
        %142 = sbr.rel (%p139) target = $region12
      $region11: #{tpu_custom_call.1} parent=5 // pred_region
        %s143 = ssub.s32 %s14, 1
        // Predicated region
        $region13: #{tpu_custom_call.1} parent=11 // pred_check
          %p144 = pneg %p61
        $region14: #{tpu_custom_call.1} parent=11 // pred_check_branch
          %146 = sbr.rel (%p144) target = $region16
        $region15: #{tpu_custom_call.1} parent=11 // pred_region
          %s148 = ssub.s32 16, 16
          %149 = vsyncadd [#allocation4], %s148
          %s151 = sshll.u32 %s1, 4
          %s152 = int_to_ptr.vmem [resolvable:$true] %s151
          %154 = dma.vmem_to_smem %s152, 16, [#allocation2], [#allocation4]
        $region16: #{tpu_custom_call.1} parent=11 // pred_fallthru
          _
        // Predicated region
        $region17: #{tpu_custom_call.1} parent=11 // pred_check
          %p155 = pneg %p82
        $region18: #{tpu_custom_call.1} parent=11 // pred_check_branch
          %157 = sbr.rel (%p155) target = $region20
        $region19: #{tpu_custom_call.1} parent=11 // pred_region
          _
        $region20: #{tpu_custom_call.1} parent=11 // pred_fallthru
          _
        // Predicated region
        $region21: #{tpu_custom_call.1} parent=11 // pred_check
          %p158 = pneg %p103
        $region22: #{tpu_custom_call.1} parent=11 // pred_check_branch
          %160 = sbr.rel (%p158) target = $region24
        $region23: #{tpu_custom_call.1} parent=11 // pred_region
          _
        $region24: #{tpu_custom_call.1} parent=11 // pred_fallthru
          _
      $region12: #{tpu_custom_call.1} parent=5 // pred_fallthru
        _
      %p161 = scmp.lt.s32.totalorder %s14, 2
      // Predicated region
      $region25: #{tpu_custom_call.1} parent=5 // pred_check
        %p162 = pneg %p161
      $region26: #{tpu_custom_call.1} parent=5 // pred_check_branch
        %164 = sbr.rel (%p162) target = $region28
      $region27: #{tpu_custom_call.1} parent=5 // pred_region
        // Predicated region
        $region29: #{tpu_custom_call.1} parent=27 // pred_check
          %p165 = pneg %p34
        $region30: #{tpu_custom_call.1} parent=27 // pred_check_branch
          %167 = sbr.rel (%p165) target = $region32
        $region31: #{tpu_custom_call.1} parent=27 // pred_region
          %p168 = scmp.lt.s32.totalorder %s14, 1
          %s169 = scalar_select %p168, %s14, 1
          %s170 = smul.addr %s169, 2
          %s171 = scalar_lea.vmem %s0, %s170
        $region32: #{tpu_custom_call.1} parent=27 // pred_fallthru
          _
      $region28: #{tpu_custom_call.1} parent=5 // pred_fallthru
        _
      %p172 = scmp.le.s32.totalorder 1, %s14
      %p173 = scmp.lt.s32.totalorder %s14, 3
      %p174 = pnand %p172, %p173
      %p175 = pneg %p174
      // Predicated region
      $region33: #{tpu_custom_call.1} parent=5 // pred_check
        _
      $region34: #{tpu_custom_call.1} parent=5 // pred_check_branch
        %177 = sbr.rel (%p174) target = $region36
      $region35: #{tpu_custom_call.1} parent=5 // pred_region
        %s178 = ssub.s32 %s14, 1
        // Predicated region
        $region37: #{tpu_custom_call.1} parent=35 // pred_check
          %p179 = pneg %p61
        $region38: #{tpu_custom_call.1} parent=35 // pred_check_branch
          %181 = sbr.rel (%p179) target = $region40
        $region39: #{tpu_custom_call.1} parent=35 // pred_region
          %182 = dma.done [#allocation4], 16
        $region40: #{tpu_custom_call.1} parent=35 // pred_fallthru
          _
        %183 = sfence
        %p184 = scmp.lt.s32.totalorder %s19, 1
        %s185 = scalar_select %p184, %s19, 1
        %s186 = smul.addr %s185, 2
        %s187 = scalar_lea.vmem %s0, %s186
        %p188 = pneg %p40
        %p189 = pneg %p37
        %p190 = pneg %p61
        %p191 = pneg %p58
        %p192 = pneg %p82
        %p193 = pneg %p79
        %p194 = pneg %p103
        %p195 = pneg %p100
        %p196 = pneg %p129
        %p197 = pneg %p126
        %s198 = sand.u32 %s116, 1
        %s199 = scalar_lea.sflag [#allocation3], %s198
        %s200 = sand.u32 %s116, 1
        %s201 = smul.addr %s200, 2
        %s202 = scalar_lea.vmem [#allocation5], %s201
        %p203 = scmp.lt.s32.totalorder %s19, 1
        %s204 = scalar_select %p203, %s19, 1
        %s205 = smul.addr %s204, 2
        %s206 = scalar_lea.vmem %s0, %s205
        %v207 = vld [vmem:[%s206] sm:$0x3]
        %v208 = vand.u32 2147483647, %v207
        %v209 = vrcp.pop 12.0
        %v210 = vmul.f32 %v208, %v209
        %v211 = vfloor.f32 %v210
        %v212 = vmul.f32 %v211, 12.0
        %v213 = vsub.f32 %v208, %v212
        %vm214 = vcmp.eq.f32.partialorder %v213, 12.0
        %v215 = vsel %vm214, 0.0, %v213
        %v216 = vand.u32 2147483647, %v215
        %v217 = vand.u32 %v207, 2147483648
        %v218 = vor.u32 %v216, %v217
        %vm219 = vcmp.ne.f32.partialorder %v218, 0.0
        %vm220 = vcmp.lt.f32.partialorder %v218, 0.0
        %vm221 = vmand %vm220, %vm219
        %v222 = vadd.f32 %v218, 12.0
        %v223 = vsel %vm221, %v222, %v218
        %v224 = vcvt.f32.s32.to.zero.pseudo %v223
        %vm225 = vcmp.gt.s32.totalorder %v224, 0
        %v226 = vsel %vm225, %v224, 0
        %vm227 = vcmp.lt.s32.totalorder %v226, 11
        %v228 = vsel %vm227, %v226, 11
        %s229 = sld [smem:[#allocation2]]
        %vm230 = vcmp.eq.s32.totalorder %v228, 0
        %v231 = vsel %vm230, 1, 0
        %v232 = vcvt.s32.f32 %v231
        %v233 = vstv %s229
        %v234 = vmul.f32 %v233, %v232
        %v235 = vadd.f32 %v234, 0.0
        %s236 = sld [smem:[#allocation2 + $0x1]]
        %vm237 = vcmp.eq.s32.totalorder %v228, 1
        %v238 = vsel %vm237, 1, 0
        %v239 = vcvt.s32.f32 %v238
        %v240 = vstv %s236
        %v241 = vmul.f32 %v240, %v239
        %v242 = vadd.f32 %v235, %v241
        %s243 = sld [smem:[#allocation2 + $0x2]]
        %vm244 = vcmp.eq.s32.totalorder %v228, 2
        %v245 = vsel %vm244, 1, 0
        %v246 = vcvt.s32.f32 %v245
        %v247 = vstv %s243
        %v248 = vmul.f32 %v247, %v246
        %v249 = vadd.f32 %v242, %v248
        %s250 = sld [smem:[#allocation2 + $0x3]]
        %vm251 = vcmp.eq.s32.totalorder %v228, 3
        %v252 = vsel %vm251, 1, 0
        %v253 = vcvt.s32.f32 %v252
        %v254 = vstv %s250
        %v255 = vmul.f32 %v254, %v253
        %v256 = vadd.f32 %v249, %v255
        %s257 = sld [smem:[#allocation2 + $0x4]]
        %vm258 = vcmp.eq.s32.totalorder %v228, 4
        %v259 = vsel %vm258, 1, 0
        %v260 = vcvt.s32.f32 %v259
        %v261 = vstv %s257
        %v262 = vmul.f32 %v261, %v260
        %v263 = vadd.f32 %v256, %v262
        %s264 = sld [smem:[#allocation2 + $0x5]]
        %vm265 = vcmp.eq.s32.totalorder %v228, 5
        %v266 = vsel %vm265, 1, 0
        %v267 = vcvt.s32.f32 %v266
        %v268 = vstv %s264
        %v269 = vmul.f32 %v268, %v267
        %v270 = vadd.f32 %v263, %v269
        %s271 = sld [smem:[#allocation2 + $0x6]]
        %vm272 = vcmp.eq.s32.totalorder %v228, 6
        %v273 = vsel %vm272, 1, 0
        %v274 = vcvt.s32.f32 %v273
        %v275 = vstv %s271
        %v276 = vmul.f32 %v275, %v274
        %v277 = vadd.f32 %v270, %v276
        %s278 = sld [smem:[#allocation2 + $0x7]]
        %vm279 = vcmp.eq.s32.totalorder %v228, 7
        %v280 = vsel %vm279, 1, 0
        %v281 = vcvt.s32.f32 %v280
        %v282 = vstv %s278
        %v283 = vmul.f32 %v282, %v281
        %v284 = vadd.f32 %v277, %v283
        %s285 = sld [smem:[#allocation2 + $0x8]]
        %vm286 = vcmp.eq.s32.totalorder %v228, 8
        %v287 = vsel %vm286, 1, 0
        %v288 = vcvt.s32.f32 %v287
        %v289 = vstv %s285
        %v290 = vmul.f32 %v289, %v288
        %v291 = vadd.f32 %v284, %v290
        %s292 = sld [smem:[#allocation2 + $0x9]]
        %vm293 = vcmp.eq.s32.totalorder %v228, 9
        %v294 = vsel %vm293, 1, 0
        %v295 = vcvt.s32.f32 %v294
        %v296 = vstv %s292
        %v297 = vmul.f32 %v296, %v295
        %v298 = vadd.f32 %v291, %v297
        %s299 = sld [smem:[#allocation2 + $0xa]]
        %vm300 = vcmp.eq.s32.totalorder %v228, 10
        %v301 = vsel %vm300, 1, 0
        %v302 = vcvt.s32.f32 %v301
        %v303 = vstv %s299
        %v304 = vmul.f32 %v303, %v302
        %v305 = vadd.f32 %v298, %v304
        %s306 = sld [smem:[#allocation2 + $0xb]]
        %vm307 = vcmp.eq.s32.totalorder %v228, 11
        %v308 = vsel %vm307, 1, 0
        %v309 = vcvt.s32.f32 %v308
        %v310 = vstv %s306
        %v311 = vmul.f32 %v310, %v309
        %v312 = vadd.f32 %v305, %v311
        %v313 = vld [vmem:[%s2] sm:$0xff]
        %v314 = vld [vmem:[%s2 + $0x8] sm:$0xff]
        %v315 = vld [vmem:[%s2 + $0x10] sm:$0xff]
        %v316 = vld [vmem:[%s2 + $0x18] sm:$0xff]
        %318 = vset.pattern.permute.xlu0 0
        %319 = vperm.xlu0 %318, %v313
        %v320 = vpop.permute.xlu0 %319
        %323 = vset.pattern.permute.xlu0 0
        %324 = vperm.xlu0 %323, %v314
        %v325 = vpop.permute.xlu0 %324
        %328 = vset.pattern.permute.xlu0 0
        %329 = vperm.xlu0 %328, %v315
        %v330 = vpop.permute.xlu0 %329
        %333 = vset.pattern.permute.xlu0 0
        %334 = vperm.xlu0 %333, %v316
        %v335 = vpop.permute.xlu0 %334
        %v338 = vlaneseq
        %v339 = vshrl.u32 %v338, 7
        %v340 = vsub.s32 0, %v339
        %v341 = vrot.slane %v207, %v340
        %v342 = vlaneseq
        %v343 = vshrl.u32 %v342, 7
        %v344 = vsub.s32 1, %v343
        %v345 = vrot.slane %v207, %v344
        %v348 = vmul.f32 %v320, %v341
        %v349 = vmul.f32 %v320, %v345
        %v350 = vmul.f32 %v325, %v341
        %v351 = vmul.f32 %v325, %v345
        %v352 = vmul.f32 %v330, %v341
        %v353 = vmul.f32 %v330, %v345
        %v354 = vmul.f32 %v335, %v341
        %v355 = vmul.f32 %v335, %v345
        %356 = vset.pattern.permute.xlu0 1
        %357 = vperm.xlu0 %356, %v313
        %v358 = vpop.permute.xlu0 %357
        %360 = vset.pattern.permute.xlu0 1
        %361 = vperm.xlu0 %360, %v314
        %v362 = vpop.permute.xlu0 %361
        %364 = vset.pattern.permute.xlu0 1
        %365 = vperm.xlu0 %364, %v315
        %v366 = vpop.permute.xlu0 %365
        %368 = vset.pattern.permute.xlu0 1
        %369 = vperm.xlu0 %368, %v316
        %v370 = vpop.permute.xlu0 %369
        %v372 = vadd.f32 %v348, %v358
        %v373 = vadd.f32 %v349, %v358
        %v374 = vadd.f32 %v350, %v362
        %v375 = vadd.f32 %v351, %v362
        %v376 = vadd.f32 %v352, %v366
        %v377 = vadd.f32 %v353, %v366
        %v378 = vadd.f32 %v354, %v370
        %v379 = vadd.f32 %v355, %v370
        %v380 = vld [vmem:[%s3] sm:$0x1]
        %v381 = vmul.f32 %v372, 0.5235988
        %v382 = vmul.f32 %v373, 0.5235988
        %v383 = vand.u32 2147483647, %v381
        %vm384 = vcmp.le.f32.partialorder %v383, 0.7853982
        %vm385 = vcmp.lt.s32.totalorder %v381, 0
        %v386 = vand.u32 %v381, 2139095040
        %v387 = vshrl.u32 %v386, 23
        %v388 = vsub.s32 %v387, 127
        %v389 = vand.u32 2147483647, %v381
        %v390 = vand.u32 %v389, 8388607
        %v391 = vor.u32 %v390, 8388608
        %v392 = vsub.s32 0, %v391
        %v393 = vadd.s32 %v388, 1
        %vm394 = vcmp.gt.s32.totalorder %v393, 0
        %v395 = vsel %vm394, %v393, 0
        %v396 = vshrl.u32 %v395, 5
        %v397 = vand.u32 %v395, 31
        %v398 = vsub.s32 32, %v397
        %v399 = vshrl.u32 683565275, %v398
        %v400 = vshll.u32 683565275, %v397
        %v401 = vshrl.u32 2475754826, %v398
        %v402 = vor.u32 %v400, %v401
        %v403 = vshll.u32 2475754826, %v397
        %v404 = vshrl.u32 2131351028, %v398
        %v405 = vor.u32 %v403, %v404
        %v406 = vshll.u32 2131351028, %v397
        %v407 = vshrl.u32 2102212464, %v398
        %v408 = vor.u32 %v406, %v407
        %v409 = vshll.u32 2102212464, %v397
        %v410 = vshrl.u32 920167782, %v398
        %v411 = vor.u32 %v409, %v410
        %v412 = vshll.u32 920167782, %v397
        %v413 = vshrl.u32 1326507024, %v398
        %v414 = vor.u32 %v412, %v413
        %vm415 = vcmp.lt.s32.totalorder %v396, 1
        %vm416 = vcmp.lt.s32.totalorder %v396, 2
        %vm417 = vcmp.lt.s32.totalorder %v396, 3
        %vm418 = vcmp.lt.s32.totalorder %v396, 4
        %v419 = vsel %vm415, %v399, %v402
        %v420 = vsel %vm418, %v408, 2102212464
        %v421 = vsel %vm417, %v405, %v420
        %v422 = vsel %vm416, %v419, %v421
        %v423 = vsel %vm415, %v402, %v405
        %v424 = vsel %vm418, %v411, 920167782
        %v425 = vsel %vm417, %v408, %v424
        %v426 = vsel %vm416, %v423, %v425
        %v427 = vsel %vm415, %v405, %v408
        %v428 = vsel %vm418, %v414, 1326507024
        %v429 = vsel %vm417, %v411, %v428
        %v430 = vsel %vm416, %v427, %v429
        %v431 = vshll.u32 %v391, 8
        %v432 = vmul.u32.u64.compose %v431, %v430
        %v433 = vextract.low.u32 %v432
        %v434 = vextract.high.u32 %v432
        %v435 = vmul.u32.u64.compose %v431, %v426
        %v436 = vextract.low.u32 %v435
        %v437 = vextract.high.u32 %v435
        %v438 = vmul.u32 %v431, %v422
        %v439 = vadd.s32 %v434, %v436
        %vm440 = vc.u32 %v434, %v436
        %v441 = vadd.s32 %v437, 1
        %v442 = vsel %vm440, %v441, %v437
        %v443 = vadd.s32 %v438, %v442
        %v444 = vadd.s32 %v443, 536870912
        %v445 = vshrl.u32 %v444, 30
        %v446 = vshll.u32 %v445, 30
        %v447 = vsub.s32 %v443, %v446
        %vm448 = vcmp.lt.s32.totalorder %v447, 0
        %v449 = vsub.s32 0, %v447
        %v450 = vsel %vm448, %v449, %v447
        %v451 = vclz %v450
        %v452 = vsub.s32 %v451, 2
        %vm453 = vcmp.gt.s32.totalorder 0, %v452
        %v454 = vsel %vm453, 0, %v452
        %v455 = vsub.s32 32, %v454
        %v456 = vshll.u32 %v447, %v454
        %v457 = vshrl.u32 %v439, %v455
        %v458 = vor.u32 %v456, %v457
        %v459 = vsub.s32 4294967266, %v454
        %v460 = vadd.s32 %v459, 127
        %v461 = vshll.u32 %v460, 23
        %v462 = vor.u32 4788187, %v461
        %v463 = vand.u32 2147483647, %v462
        %v465 = vcvt.s32.f32 %v458
        %v466 = vmul.f32 %v465, %v463
        %v467 = vxor.u32 %v466, 2147483648
        %v468 = vsel %vm385, %v467, %v466
        %v469 = vsub.s32 4, %v445
        %v470 = vsel %vm385, %v469, %v445
        %v471 = vsel %vm384, %v381, %v468
        %v472 = vsel %vm384, 0, %v470
        %v473 = vcosq.f32.pop %v471
        %v474 = vsinq.f32.pop %v471
        %vm475 = vweird.f32 %v381
        %v476 = vand.u32 %v472, 3
        %vm477 = vcmp.lt.s32.totalorder %v476, 2
        %vm478 = vcmp.eq.s32.totalorder %v476, 0
        %v479 = vxor.u32 %v474, 2147483648
        %v480 = vsel %vm478, %v473, %v479
        %vm481 = vcmp.eq.s32.totalorder %v476, 2
        %v482 = vxor.u32 %v473, 2147483648
        %v483 = vsel %vm481, %v482, %v474
        %v484 = vsel %vm477, %v480, %v483
        %v485 = vsel %vm475, nan, %v484
        %v486 = vand.u32 2147483647, %v382
        %vm487 = vcmp.le.f32.partialorder %v486, 0.7853982
        %vm488 = vcmp.lt.s32.totalorder %v382, 0
        %v489 = vand.u32 %v382, 2139095040
        %v490 = vshrl.u32 %v489, 23
        %v491 = vsub.s32 %v490, 127
        %v492 = vand.u32 2147483647, %v382
        %v493 = vand.u32 %v492, 8388607
        %v494 = vor.u32 %v493, 8388608
        %v495 = vsub.s32 0, %v494
        %v496 = vadd.s32 %v491, 1
        %vm497 = vcmp.gt.s32.totalorder %v496, 0
        %v498 = vsel %vm497, %v496, 0
        %v499 = vshrl.u32 %v498, 5
        %v500 = vand.u32 %v498, 31
        %v501 = vsub.s32 32, %v500
        %v502 = vshrl.u32 683565275, %v501
        %v503 = vshll.u32 683565275, %v500
        %v504 = vshrl.u32 2475754826, %v501
        %v505 = vor.u32 %v503, %v504
        %v506 = vshll.u32 2475754826, %v500
        %v507 = vshrl.u32 2131351028, %v501
        %v508 = vor.u32 %v506, %v507
        %v509 = vshll.u32 2131351028, %v500
        %v510 = vshrl.u32 2102212464, %v501
        %v511 = vor.u32 %v509, %v510
        %v512 = vshll.u32 2102212464, %v500
        %v513 = vshrl.u32 920167782, %v501
        %v514 = vor.u32 %v512, %v513
        %v515 = vshll.u32 920167782, %v500
        %v516 = vshrl.u32 1326507024, %v501
        %v517 = vor.u32 %v515, %v516
        %vm518 = vcmp.lt.s32.totalorder %v499, 1
        %vm519 = vcmp.lt.s32.totalorder %v499, 2
        %vm520 = vcmp.lt.s32.totalorder %v499, 3
        %vm521 = vcmp.lt.s32.totalorder %v499, 4
        %v522 = vsel %vm518, %v502, %v505
        %v523 = vsel %vm521, %v511, 2102212464
        %v524 = vsel %vm520, %v508, %v523
        %v525 = vsel %vm519, %v522, %v524
        %v526 = vsel %vm518, %v505, %v508
        %v527 = vsel %vm521, %v514, 920167782
        %v528 = vsel %vm520, %v511, %v527
        %v529 = vsel %vm519, %v526, %v528
        %v530 = vsel %vm518, %v508, %v511
        %v531 = vsel %vm521, %v517, 1326507024
        %v532 = vsel %vm520, %v514, %v531
        %v533 = vsel %vm519, %v530, %v532
        %v534 = vshll.u32 %v494, 8
        %v535 = vmul.u32.u64.compose %v534, %v533
        %v536 = vextract.low.u32 %v535
        %v537 = vextract.high.u32 %v535
        %v538 = vmul.u32.u64.compose %v534, %v529
        %v539 = vextract.low.u32 %v538
        %v540 = vextract.high.u32 %v538
        %v541 = vmul.u32 %v534, %v525
        %v542 = vadd.s32 %v537, %v539
        %vm543 = vc.u32 %v537, %v539
        %v544 = vadd.s32 %v540, 1
        %v545 = vsel %vm543, %v544, %v540
        %v546 = vadd.s32 %v541, %v545
        %v547 = vadd.s32 %v546, 536870912
        %v548 = vshrl.u32 %v547, 30
        %v549 = vshll.u32 %v548, 30
        %v550 = vsub.s32 %v546, %v549
        %vm551 = vcmp.lt.s32.totalorder %v550, 0
        %v552 = vsub.s32 0, %v550
        %v553 = vsel %vm551, %v552, %v550
        %v554 = vclz %v553
        %v555 = vsub.s32 %v554, 2
        %vm556 = vcmp.gt.s32.totalorder 0, %v555
        %v557 = vsel %vm556, 0, %v555
        %v558 = vsub.s32 32, %v557
        %v559 = vshll.u32 %v550, %v557
        %v560 = vshrl.u32 %v542, %v558
        %v561 = vor.u32 %v559, %v560
        %v562 = vsub.s32 4294967266, %v557
        %v563 = vadd.s32 %v562, 127
        %v564 = vshll.u32 %v563, 23
        %v565 = vor.u32 4788187, %v564
        %v566 = vand.u32 2147483647, %v565
        %v568 = vcvt.s32.f32 %v561
        %v569 = vmul.f32 %v568, %v566
        %v570 = vxor.u32 %v569, 2147483648
        %v571 = vsel %vm488, %v570, %v569
        %v572 = vsub.s32 4, %v548
        %v573 = vsel %vm488, %v572, %v548
        %v574 = vsel %vm487, %v382, %v571
        %v575 = vsel %vm487, 0, %v573
        %v576 = vcosq.f32.pop %v574
        %v577 = vsinq.f32.pop %v574
        %vm578 = vweird.f32 %v382
        %v579 = vand.u32 %v575, 3
        %vm580 = vcmp.lt.s32.totalorder %v579, 2
        %vm581 = vcmp.eq.s32.totalorder %v579, 0
        %v582 = vxor.u32 %v577, 2147483648
        %v583 = vsel %vm581, %v576, %v582
        %vm584 = vcmp.eq.s32.totalorder %v579, 2
        %v585 = vxor.u32 %v576, 2147483648
        %v586 = vsel %vm584, %v585, %v577
        %v587 = vsel %vm580, %v583, %v586
        %v588 = vsel %vm578, nan, %v587
        %v589 = vmax.f32 %v374, 0.0
        %v590 = vmax.f32 %v375, 0.0
        %v591 = vmax.f32 %v376, 0.0
        %v592 = vmax.f32 %v377, 0.0
        %v593 = vmax.f32 %v378, 0.0
        %v594 = vmax.f32 %v379, 0.0
        %v596 = vlaneseq
        %v597 = vshrl.u32 %v596, 7
        %v598 = vsub.s32 0, %v597
        %v599 = vrot.slane %v380, %v598
        %600 = vrot.lane.b32.xlu0 %v599, 120
        %v601 = vpop.permute.xlu0 %600
        %vm602 = vcmask 195584
        %v603 = vsel %vm602, %v601, 0
        %605 = vmatprep.subr.mxu0 %v590
        %606 = vmatpush1.msra.mxu0 %v589
        %607 = vmatprep.subr.mxu0 %v592
        %608 = vmatpush1.msra.mxu0 %v591
        %609 = vmatprep.subr.mxu0 %v594
        %610 = vmatpush1.msra.mxu0 %v593
        %611 = vmatprep.subr.mxu0 0.0
        %612 = vmatpush1.msra.mxu0 0.0
        %613 = vmatprep.subr.mxu0 0.0
        %614 = vmatpush1.msra.mxu0 0.0
        %615 = vmatprep.subr.mxu0 0.0
        %616 = vmatpush1.msra.mxu0 0.0
        %617 = vmatprep.subr.mxu0 0.0
        %618 = vmatpush1.msra.mxu0 0.0
        %619 = vmatprep.subr.mxu0 0.0
        %620 = vmatpush1.msra.mxu0 0.0
        %621 = vmatprep.subr.mxu0 0.0
        %622 = vmatpush1.msra.mxu0 0.0
        %623 = vmatprep.subr.mxu0 0.0
        %624 = vmatpush1.msra.mxu0 0.0
        %625 = vmatprep.subr.mxu0 0.0
        %626 = vmatpush1.msra.mxu0 0.0
        %627 = vmatprep.subr.mxu0 0.0
        %628 = vmatpush1.msra.mxu0 0.0
        %629 = vmatprep.subr.mxu0 0.0
        %630 = vmatpush1.msra.mxu0 0.0
        %631 = vmatprep.subr.mxu0 0.0
        %632 = vmatpush1.msra.mxu0 0.0
        %633 = vmatprep.subr.mxu0 0.0
        %634 = vmatpush1.msra.mxu0 0.0
        %635 = vmatprep.subr.mxu0 0.0
        %636 = vmatpush1.msra.mxu0 0.0
        %637 = vmatprep.subr.mxu0 0.0
        %638 = vmatpush1.msra.mxu0 0.0
        %639 = vmatprep.subr.mxu0 0.0
        %640 = vmatpush1.msra.mxu0 0.0
        %641 = vmatprep.subr.mxu0 0.0
        %642 = vmatpush1.msra.mxu0 0.0
        %643 = vmatprep.subr.mxu0 0.0
        %644 = vmatpush1.msra.mxu0 0.0
        %645 = vmatprep.subr.mxu0 0.0
        %646 = vmatpush1.msra.mxu0 0.0
        %647 = vmatprep.subr.mxu0 0.0
        %648 = vmatpush1.msra.mxu0 0.0
        %649 = vmatprep.subr.mxu0 0.0
        %650 = vmatpush1.msra.mxu0 0.0
        %651 = vmatprep.subr.mxu0 0.0
        %652 = vmatpush1.msra.mxu0 0.0
        %653 = vmatprep.subr.mxu0 0.0
        %654 = vmatpush1.msra.mxu0 0.0
        %655 = vmatprep.subr.mxu0 0.0
        %656 = vmatpush1.msra.mxu0 0.0
        %657 = vmatprep.subr.mxu0 0.0
        %658 = vmatpush1.msra.mxu0 0.0
        %659 = vmatprep.subr.mxu0 0.0
        %660 = vmatpush1.msra.mxu0 0.0
        %661 = vmatprep.subr.mxu0 0.0
        %662 = vmatpush1.msra.mxu0 0.0
        %663 = vmatprep.subr.mxu0 0.0
        %664 = vmatpush1.msra.mxu0 0.0
        %665 = vmatprep.subr.mxu0 0.0
        %666 = vmatpush1.msra.mxu0 0.0
        %667 = vmatprep.subr.mxu0 0.0
        %668 = vmatpush1.msra.mxu0 0.0
        %669 = vmatprep.mubr.f32.mxu0 0.0
        %670 = vmatmul.mubr.f32.gmra.mrb[0].mxu0 %v603
        %v671 = vpop.f32.mrb[0].mxu0
        %v672 = vadd.f32 0.0, %v671
        %v673 = vpop.f32.mrb[0].mxu0
        %v674 = vadd.f32 0.0, %v673
        %675 = vdwg.mxu0
        %vm676 = vcmask 64512
        %v677 = vsel %vm676, %v380, 0
        %679 = vmatprep.subr.mxu0 %v588
        %680 = vmatpush1.msra.mxu0 %v485
        %681 = vmatprep.subr.mxu0 0.0
        %682 = vmatpush1.msra.mxu0 0.0
        %683 = vmatprep.subr.mxu0 0.0
        %684 = vmatpush1.msra.mxu0 0.0
        %685 = vmatprep.subr.mxu0 0.0
        %686 = vmatpush1.msra.mxu0 0.0
        %687 = vmatprep.subr.mxu0 0.0
        %688 = vmatpush1.msra.mxu0 0.0
        %689 = vmatprep.subr.mxu0 0.0
        %690 = vmatpush1.msra.mxu0 0.0
        %691 = vmatprep.subr.mxu0 0.0
        %692 = vmatpush1.msra.mxu0 0.0
        %693 = vmatprep.subr.mxu0 0.0
        %694 = vmatpush1.msra.mxu0 0.0
        %695 = vmatprep.subr.mxu0 0.0
        %696 = vmatpush1.msra.mxu0 0.0
        %697 = vmatprep.subr.mxu0 0.0
        %698 = vmatpush1.msra.mxu0 0.0
        %699 = vmatprep.subr.mxu0 0.0
        %700 = vmatpush1.msra.mxu0 0.0
        %701 = vmatprep.subr.mxu0 0.0
        %702 = vmatpush1.msra.mxu0 0.0
        %703 = vmatprep.subr.mxu0 0.0
        %704 = vmatpush1.msra.mxu0 0.0
        %705 = vmatprep.subr.mxu0 0.0
        %706 = vmatpush1.msra.mxu0 0.0
        %707 = vmatprep.subr.mxu0 0.0
        %708 = vmatpush1.msra.mxu0 0.0
        %709 = vmatprep.subr.mxu0 0.0
        %710 = vmatpush1.msra.mxu0 0.0
        %711 = vmatprep.subr.mxu0 0.0
        %712 = vmatpush1.msra.mxu0 0.0
        %713 = vmatprep.subr.mxu0 0.0
        %714 = vmatpush1.msra.mxu0 0.0
        %715 = vmatprep.subr.mxu0 0.0
        %716 = vmatpush1.msra.mxu0 0.0
        %717 = vmatprep.subr.mxu0 0.0
        %718 = vmatpush1.msra.mxu0 0.0
        %719 = vmatprep.subr.mxu0 0.0
        %720 = vmatpush1.msra.mxu0 0.0
        %721 = vmatprep.subr.mxu0 0.0
        %722 = vmatpush1.msra.mxu0 0.0
        %723 = vmatprep.subr.mxu0 0.0
        %724 = vmatpush1.msra.mxu0 0.0
        %725 = vmatprep.subr.mxu0 0.0
        %726 = vmatpush1.msra.mxu0 0.0
        %727 = vmatprep.subr.mxu0 0.0
        %728 = vmatpush1.msra.mxu0 0.0
        %729 = vmatprep.subr.mxu0 0.0
        %730 = vmatpush1.msra.mxu0 0.0
        %731 = vmatprep.subr.mxu0 0.0
        %732 = vmatpush1.msra.mxu0 0.0
        %733 = vmatprep.subr.mxu0 0.0
        %734 = vmatpush1.msra.mxu0 0.0
        %735 = vmatprep.subr.mxu0 0.0
        %736 = vmatpush1.msra.mxu0 0.0
        %737 = vmatprep.subr.mxu0 0.0
        %738 = vmatpush1.msra.mxu0 0.0
        %739 = vmatprep.subr.mxu0 0.0
        %740 = vmatpush1.msra.mxu0 0.0
        %741 = vmatprep.subr.mxu0 0.0
        %742 = vmatpush1.msra.mxu0 0.0
        %743 = vmatprep.mubr.f32.mxu0 0.0
        %744 = vmatmul.mubr.f32.gmra.mrb[0].mxu0 %v677
        %v745 = vpop.f32.mrb[0].mxu0
        %v746 = vadd.f32 %v672, %v745
        %v747 = vpop.f32.mrb[0].mxu0
        %v748 = vadd.f32 %v674, %v747
        %749 = vdwg.mxu0
        %v752 = vcombine.low %v746, %v748
        %v754 = vunpack.c.l.s4 1966171168
        %v755 = vunpack.c.0.s8 %v754
        %v756 = vlaneseq
        %v757 = vshrl.u32 %v756, 7
        %v758 = vsub.s32 %v755, %v757
        %v759 = vrot.slane %v752, %v758
        %v761 = vunpack.c.l.s4 1966171168
        %v762 = vunpack.c.0.s8 %v761
        %v763 = vlaneseq
        %v764 = vshrl.u32 %v763, 7
        %v765 = vsub.s32 %v762, %v764
        %v766 = vrot.slane %v759, %v765
        %v768 = vadd.f32 %v312, %v766
        %v769 = vlaneseq
        %vm770 = vcmp.ge.s32.totalorder %v769, 0
        %vm771 = vcmp.lt.s32.totalorder %v769, 256
        %vm772 = vmand %vm770, %vm771
        %773 = vst.msk [vmem:[%s202] sm:$0x3] %vm772, %v768
        %s774 = sand.u32 %s116, 1
        %s775 = scalar_lea.sflag [#allocation3], %s774
        %s776 = sand.u32 %s116, 1
        %s777 = smul.addr %s776, 2
        %s778 = scalar_lea.vmem [#allocation5], %s777
        // Predicated region
        $region41: #{tpu_custom_call.1} parent=35 // pred_check
          %p779 = pneg %p126
        $region42: #{tpu_custom_call.1} parent=35 // pred_check_branch
          %781 = sbr.rel (%p779) target = $region44
        $region43: #{tpu_custom_call.1} parent=35 // pred_region
          %s783 = ssub.s32 32, 32
          %784 = vsyncadd %s775, %s783
          %s785 = smul.addr %s19, 2
          %s786 = smul.addr %s785, 16
          %s787 = scalar_lea.hbm %s4, %s786
          %s789 = sshll.u32 %s778, 4
          %s790 = int_to_ptr.vmem [resolvable:$true] %s789
          %792 = dma.vmem_to_hbm [thread:$0]  %s790, 32, %s787, %s775
        $region44: #{tpu_custom_call.1} parent=35 // pred_fallthru
          _
      $region36: #{tpu_custom_call.1} parent=5 // pred_fallthru
        _
      %p793 = scmp.le.s32.totalorder 2, %s14
      // Predicated region
      $region45: #{tpu_custom_call.1} parent=5 // pred_check
        %p794 = pneg %p793
      $region46: #{tpu_custom_call.1} parent=5 // pred_check_branch
        %796 = sbr.rel (%p794) target = $region48
      $region47: #{tpu_custom_call.1} parent=5 // pred_region
        %s797 = ssub.s32 %s14, 2
        // Predicated region
        $region49: #{tpu_custom_call.1} parent=47 // pred_check
          %p798 = pneg %p132
        $region50: #{tpu_custom_call.1} parent=47 // pred_check_branch
          %800 = sbr.rel (%p798) target = $region52
        $region51: #{tpu_custom_call.1} parent=47 // pred_region
          %s801 = sand.u32 %s117, 1
          %s802 = scalar_lea.sflag [#allocation3], %s801
          %s803 = sand.u32 %s117, 1
          %s804 = smul.addr %s803, 2
          %s805 = scalar_lea.vmem [#allocation5], %s804
          %806 = dma.done %s802, 32
        $region52: #{tpu_custom_call.1} parent=47 // pred_fallthru
          _
      $region48: #{tpu_custom_call.1} parent=5 // pred_fallthru
        _
    $region6: #{tpu_custom_call.1} parent=1 // loop_footer
      %s18 = sadd.s32 1, %s14
    $region7: #{tpu_custom_call.1} parent=1 // loop_footer_branch
      %13 = sbr.rel target = $region3
    $region8: #{tpu_custom_call.1} parent=1 // loop_exit
      _
    %807 = vsyncpa [#allocation3], 1
    %s808 = scalar_lea.sflag [#allocation3], 1
    %809 = vsyncpa %s808, 1
    %810 = vsyncpa [#allocation4], 1
    %s811 = scalar_lea.sflag [#allocation4], 1
    %812 = vsyncpa %s811, 1

</llo_original>
